<compile_context>
chip_gen: v6e
topology: v6e:2x2x1
jax: 0.10.0
libtpu: 0.0.40
codegen_flags: <defaults>
</compile_context>

<pallas_src>
import jax
import jax.numpy as jnp
import numpy as np
from jax.experimental import pallas as pl
from jax.experimental.pallas import tpu as pltpu


# Packed-weight row offsets (all multiples of 16 -> aligned bf16 sublane tiles).
#   rows    0: 512, lanes 0:256  -> layer-1 state part (cv_fc_1 | zeros)
#   rows  512: 640, lanes 0:256  -> layer-1 action part (zeros | linear1) + bias row
#   rows  640: 896, lanes 0:256  -> fused layer 2 (cv_fc_2 | linear2)
#   rows  896:1152, lanes 0:128  -> linear3 (acts on the [x | o2] concat layout)
#   rows  896:1024, lanes 128:256-> linear4 head
# Lane 127 of every activation carries the constant 1.0 so biases live as
# weight rows (bias-add happens inside the matmul, no VPU adds).


def _critic_kernel(s_ref, a_ref, w_ref, out_ref):
    f32 = jnp.float32
    bf16 = jnp.bfloat16
    relu = lambda v: jnp.maximum(v, 0.0)

    s = s_ref[...]                                    # (1, 512) bf16
    a = a_ref[...]                                    # (1, 128) bf16, lane 127 == 1.0

    # fused layer 1: [cv_fc_1 | linear1] as two partial dots (state part, action part).
    # biases b1/ba1 ride on the constant-1 lane of `a`.
    h1 = relu(jnp.dot(s, w_ref[0:512, :], preferred_element_type=f32)
              + jnp.dot(a, w_ref[512:640, :], preferred_element_type=f32))
    # h1 lanes: 0:100 = x1, 127 = 1.0 (carry), 128:256 = o1

    # fused layer 2: [cv_fc_2 | linear2] block-diagonal; output already IS the
    # [x | o2] concat layout (lanes 0:100 = x, 128:228 = o2, 127 = 1.0 carry).
    h2 = relu(jnp.dot(h1.astype(bf16), w_ref[640:896, :],
                      preferred_element_type=f32))

    # linear3 over the concat layout (padded rows are zero), 128-lane output.
    h3 = relu(jnp.dot(h2.astype(bf16), w_ref[896:1152, 0:128],
                      preferred_element_type=f32))
    # h3 lanes: 0:64 = o3, 127 = 1.0 (carry)

    # linear4 head + tanh; only lane 0 is real (other lanes tanh(0)=0).
    out_ref[...] = jnp.tanh(jnp.dot(h3.astype(bf16), w_ref[896:1024, 128:256],
                                    preferred_element_type=f32))


def _linear_params(key, fan_in, fan_out):
    """torch.nn.Linear-style init: U(-1/sqrt(fan_in), 1/sqrt(fan_in)).
    Weight returned already transposed to (fan_in, fan_out); bias (fan_out,)."""
    kw, kb = jax.random.split(key)
    bound = 1.0 / float(np.sqrt(fan_in))
    w = jax.random.uniform(kw, (fan_in, fan_out), jnp.float32, -bound, bound)
    b = jax.random.uniform(kb, (fan_out,), jnp.float32, -bound, bound)
    return w, b


def _pack_params(raw, agent_num):
    """Pack the 6 Linear layers (weights AND biases) into one bf16 slab."""
    (w1, b1, w2, b2, wa1, ba1, wa2, ba2, w3, b3, w4, b4) = raw

    W = jnp.zeros((1152, 256), jnp.float32)

    # --- fused layer 1 (rows 0:640): [state(512) | actions+const(128)] -> [x1 |1| o1]
    W = W.at[0:512, 0:100].set(w1)                        # cv_fc_1
    W = W.at[512:512 + agent_num, 128:256].set(wa1)       # linear1
    W = W.at[639, 0:100].set(b1)                          # b1 via constant lane
    W = W.at[639, 128:256].set(ba1)                       # ba1 via constant lane
    W = W.at[639, 127].set(1.0)                           # propagate the constant

    # --- fused layer 2 (rows 640:896): [x1 |1| o1] -> [x2 |1| o2]
    W = W.at[640:740, 0:100].set(w2)                      # cv_fc_2
    W = W.at[768:896, 128:228].set(wa2)                   # linear2
    W = W.at[767, 0:100].set(b2)
    W = W.at[767, 128:228].set(ba2)
    W = W.at[767, 127].set(1.0)

    # --- linear3 (rows 896:1152, lanes 0:128): [x2 |1| o2] -> [o3 |1]
    W = W.at[896:996, 0:64].set(w3[:100])                 # x-part of the concat
    W = W.at[1024:1124, 0:64].set(w3[100:])               # o2-part of the concat
    W = W.at[1023, 0:64].set(b3)
    W = W.at[1023, 127].set(1.0)

    # --- linear4 head (rows 896:1024, lanes 128:256): [o3 |1] -> value at lane 0
    W = W.at[896:960, 128:129].set(w4)
    W = W.at[1023, 128].set(b4[0])

    return W.astype(jnp.bfloat16)                         # (1152, 256) bf16 ~ 0.58 MB


def make_critic(agent_num, key):
    # Lane 127 is reserved for the bias-carry constant; actions live in lanes 0:127.
    assert 1 <= agent_num <= 127, "packing supports agent_num <= 127"

    keys = jax.random.split(key, 6)
    w1, b1 = _linear_params(keys[0], 512, 100)            # cv_fc_1
    w2, b2 = _linear_params(keys[1], 100, 100)            # cv_fc_2
    wa1, ba1 = _linear_params(keys[2], agent_num, 128)    # linear1
    wa2, ba2 = _linear_params(keys[3], 128, 100)          # linear2
    w3, b3 = _linear_params(keys[4], 200, 64)             # linear3
    w4, b4 = _linear_params(keys[5], 64, 1)               # linear4
    raw = (w1, b1, w2, b2, wa1, ba1, wa2, ba2, w3, b3, w4, b4)

    w_big = _pack_params(raw, agent_num)

    critic_call = pl.pallas_call(
        _critic_kernel,
        out_shape=jax.ShapeDtypeStruct((1, 128), jnp.float32),
        in_specs=[pl.BlockSpec(memory_space=pltpu.MemorySpace.VMEM)] * 3,
        out_specs=pl.BlockSpec(memory_space=pltpu.MemorySpace.VMEM),
    )

    @jax.jit
    def forward(state, actions):
        # actions.reshape(1, agent_num) as in the module; build the tiny
        # (1, 128) action row with the constant-1 carry lane (lane 127).
        s = state.reshape(1, 512).astype(jnp.bfloat16)
        a = actions.reshape(-1).astype(jnp.bfloat16)
        a_row = (jnp.zeros((1, 128), jnp.bfloat16)
                 .at[0, :agent_num].set(a)
                 .at[0, 127].set(1.0))
        out = critic_call(s, a_row, w_big)                 # (1, 128) f32
        return out[0:1, 0:1]                               # (1, 1)

    return forward, raw


def _reference_forward(state, actions, raw, agent_num):
    """Pure-JAX f32 reference mirroring the PyTorch module exactly (incl. the concat)."""
    (w1, b1, w2, b2, wa1, ba1, wa2, ba2, w3, b3, w4, b4) = raw
    relu = lambda v: jnp.maximum(v, 0.0)
    s = state.reshape(1, 512)
    a = actions.reshape(1, agent_num)
    x = relu(s @ w1 + b1)
    x = relu(x @ w2 + b2)
    o1 = relu(a @ wa1 + ba1)
    o2 = relu(o1 @ wa2 + ba2).reshape(1, 100)
    cat = jnp.concatenate((x, o2), axis=1)
    o3 = relu(cat @ w3 + b3)
    return jnp.tanh(o3 @ w4 + b4)


if __name__ == "__main__":
    agent_num = 8
    key = jax.random.PRNGKey(0)
    k_param, k_state, k_act = jax.random.split(key, 3)

    forward, raw_params = make_critic(agent_num, k_param)

    state = jax.random.normal(k_state, (1, 512), jnp.float32)
    actions = jax.random.normal(k_act, (agent_num,), jnp.float32)

    value = jax.block_until_ready(forward(state, actions))
    ref = _reference_forward(state, actions, raw_params, agent_num)

    assert value.shape == (1, 1)
    assert bool(jnp.all(jnp.abs(value) <= 1.0))
    # bf16 weights/activations vs. f32 reference -> loose tolerance.
    assert jnp.allclose(value, ref, atol=5e-2, rtol=5e-2), (value, ref)

    print("KERNEL_OK")
</pallas_src>

<mosaic_0001>
module attributes {stable_mosaic.version = 11 : i64} {
  func.func @_critic_kernel(%arg0: memref<1x512xbf16, #tpu.memory_space<vmem>>, %arg1: memref<1x128xbf16, #tpu.memory_space<vmem>>, %arg2: memref<1152x256xbf16, #tpu.memory_space<vmem>>, %arg3: memref<1x128xf32, #tpu.memory_space<vmem>>) attributes {dimension_semantics = [], scalar_prefetch = 0 : i64, scratch_operands = 0 : i64, tpu.core_type = #tpu.core_type<tc>} {
    %c0 = arith.constant 0 : index
    %c0_0 = arith.constant 0 : index
    %0 = vector.load %arg0[%c0, %c0_0] : memref<1x512xbf16, #tpu.memory_space<vmem>>, vector<1x512xbf16>
    %c0_1 = arith.constant 0 : index
    %c0_2 = arith.constant 0 : index
    %1 = vector.load %arg1[%c0_1, %c0_2] : memref<1x128xbf16, #tpu.memory_space<vmem>>, vector<1x128xbf16>
    %c0_3 = arith.constant 0 : index
    %c0_4 = arith.constant 0 : index
    %2 = vector.load %arg2[%c0_3, %c0_4] : memref<1152x256xbf16, #tpu.memory_space<vmem>>, vector<512x256xbf16>
    %cst = arith.constant dense<0.000000e+00> : vector<1x256xf32>
    %3 = tpu.matmul %0, %2, %cst {dimension_numbers = #tpu.dot_dimension_numbers<[1], [0], [0], [1], [0, 0, 1, 1], [], []>} : vector<1x512xbf16>, vector<512x256xbf16>, vector<1x256xf32> -> vector<1x256xf32>
    %c512 = arith.constant 512 : index
    %c0_5 = arith.constant 0 : index
    %4 = vector.load %arg2[%c512, %c0_5] : memref<1152x256xbf16, #tpu.memory_space<vmem>>, vector<128x256xbf16>
    %cst_6 = arith.constant dense<0.000000e+00> : vector<1x256xf32>
    %5 = tpu.matmul %1, %4, %cst_6 {dimension_numbers = #tpu.dot_dimension_numbers<[1], [0], [0], [1], [0, 0, 1, 1], [], []>} : vector<1x128xbf16>, vector<128x256xbf16>, vector<1x256xf32> -> vector<1x256xf32>
    %6 = arith.addf %3, %5 : vector<1x256xf32>
    %cst_7 = arith.constant 0.000000e+00 : f32
    %7 = vector.broadcast %cst_7 : f32 to vector<1x256xf32>
    %8 = arith.maximumf %6, %7 : vector<1x256xf32>
    %9 = arith.truncf %8 : vector<1x256xf32> to vector<1x256xbf16>
    %c640 = arith.constant 640 : index
    %c0_8 = arith.constant 0 : index
    %10 = vector.load %arg2[%c640, %c0_8] : memref<1152x256xbf16, #tpu.memory_space<vmem>>, vector<256x256xbf16>
    %cst_9 = arith.constant dense<0.000000e+00> : vector<1x256xf32>
    %11 = tpu.matmul %9, %10, %cst_9 {dimension_numbers = #tpu.dot_dimension_numbers<[1], [0], [0], [1], [0, 0, 1, 1], [], []>} : vector<1x256xbf16>, vector<256x256xbf16>, vector<1x256xf32> -> vector<1x256xf32>
    %cst_10 = arith.constant 0.000000e+00 : f32
    %12 = vector.broadcast %cst_10 : f32 to vector<1x256xf32>
    %13 = arith.maximumf %11, %12 : vector<1x256xf32>
    %14 = arith.truncf %13 : vector<1x256xf32> to vector<1x256xbf16>
    %c896 = arith.constant 896 : index
    %c0_11 = arith.constant 0 : index
    %15 = vector.load %arg2[%c896, %c0_11] : memref<1152x256xbf16, #tpu.memory_space<vmem>>, vector<256x128xbf16>
    %cst_12 = arith.constant dense<0.000000e+00> : vector<1x128xf32>
    %16 = tpu.matmul %14, %15, %cst_12 {dimension_numbers = #tpu.dot_dimension_numbers<[1], [0], [0], [1], [0, 0, 1, 1], [], []>} : vector<1x256xbf16>, vector<256x128xbf16>, vector<1x128xf32> -> vector<1x128xf32>
    %cst_13 = arith.constant 0.000000e+00 : f32
    %17 = vector.broadcast %cst_13 : f32 to vector<1x128xf32>
    %18 = arith.maximumf %16, %17 : vector<1x128xf32>
    %19 = arith.truncf %18 : vector<1x128xf32> to vector<1x128xbf16>
    %c896_14 = arith.constant 896 : index
    %c128 = arith.constant 128 : index
    %20 = vector.load %arg2[%c896_14, %c128] : memref<1152x256xbf16, #tpu.memory_space<vmem>>, vector<128x128xbf16>
    %cst_15 = arith.constant dense<0.000000e+00> : vector<1x128xf32>
    %21 = tpu.matmul %19, %20, %cst_15 {dimension_numbers = #tpu.dot_dimension_numbers<[1], [0], [0], [1], [0, 0, 1, 1], [], []>} : vector<1x128xbf16>, vector<128x128xbf16>, vector<1x128xf32> -> vector<1x128xf32>
    %22 = math.tanh %21 : vector<1x128xf32>
    %c0_16 = arith.constant 0 : index
    %c0_17 = arith.constant 0 : index
    %23 = vector.load %arg3[%c0_16, %c0_17] : memref<1x128xf32, #tpu.memory_space<vmem>>, vector<1x128xf32>
    tpu.vector_store %arg3[%c0_16, %c0_17], %22 {strides = array<i32>} : memref<1x128xf32, #tpu.memory_space<vmem>>, vector<1x128xf32>,
    return
  }
}

</mosaic_0001>

<llo_original>
// kernel: forward.1
$region0: #{forward.1}
  #allocation0 [shape = 'u32[]', space=smem, size = 0x4, offset = 0x4, fixed_abs, tag = 'smem constant byte address 0x4 - core index']
  #allocation1 [shape = 'u32[144,128]{1,0:T(1,128)}', space=vmem, size = 0x12000, scoped, tag = 'internal scratch']
  %s0 = inlined_call_operand.vmem [shape: bf16[1,512], index: 0, kind: input, shape index: {}]
  %s1 = inlined_call_operand.vmem [shape: bf16[1,128], index: 1, kind: input, shape index: {}]
  %s2 = inlined_call_operand.hbm [shape: bf16[1152,256], index: 2, kind: input, shape index: {}]
  %s3 = inlined_call_operand.hbm [shape: f32[1,128], index: 3, kind: output, shape index: {}]
  %s4 = sld [smem:[#allocation0]]
  $region26: #{forward.1} parent=0
    _
  %s6 = ssub.s32 1, %s4
  %s7 = scalar_select 0, %s6, %s4
  $region1: #{forward.1} parent=0
    #allocation2 [shape = 'u8[589824]{0}', space=vmem, size = 0x90000, scoped, tag = 'input window, operand 2, single buffered']
    #allocation3 [shape = 's32[1]{0}', space=sflag, size = 0x4, scoped, tag = 'scoped memory for forward.1']
    #allocation4 [shape = 's32[1]{0}', space=sflag, size = 0x4, scoped, tag = 'scoped memory for forward.1']
    #allocation5 [shape = 'u8[512]{0}', space=vmem, size = 0x400, scoped, tag = 'output window, operand 0, single buffered']
    %8 = vsyncpa [#allocation3], 0
    %9 = vsyncpa [#allocation4], 0
    // Predicated region
    $region2: #{forward.1} parent=1 // pred_check
      _
    $region3: #{forward.1} parent=1 // pred_check_branch
      %11 = sbr.rel (0) target = $region5
    $region4: #{forward.1} parent=1 // pred_region
      _
    $region5: #{forward.1} parent=1 // pred_fallthru
      _
    // Predicated region
    $region6: #{forward.1} parent=1 // pred_check
      _
    $region7: #{forward.1} parent=1 // pred_check_branch
      %13 = sbr.rel (0) target = $region9
    $region8: #{forward.1} parent=1 // pred_region
      _
    $region9: #{forward.1} parent=1 // pred_fallthru
      _
    // Predicated region
    $region10: #{forward.1} parent=1 // pred_check
      _
    $region11: #{forward.1} parent=1 // pred_check_branch
      %15 = sbr.rel (0) target = $region13
    $region12: #{forward.1} parent=1 // pred_region
      %s17 = ssub.s32 18432, 18432
      %18 = vsyncadd [#allocation3], %s17
      %s19 = sshll.u32 [#allocation2], 4
      %s20 = int_to_ptr.vmem [resolvable:$true] %s19
      %25 = dma.hbm_to_vmem [thread:$0]  %s2, 18432, %s20, [#allocation3], 128, 128, 8
    $region13: #{forward.1} parent=1 // pred_fallthru
      _
    // Predicated region
    $region14: #{forward.1} parent=1 // pred_check
      _
    $region15: #{forward.1} parent=1 // pred_check_branch
      %27 = sbr.rel (0) target = $region17
    $region16: #{forward.1} parent=1 // pred_region
      %28 = dma.done [#allocation3], 18432
    $region17: #{forward.1} parent=1 // pred_fallthru
      _
    %v30 = vld [vmem:[%s0] sm:$0xf]
    %v31 = vld [vmem:[%s1] sm:$0x1]
    %v32 = vld [vmem:[#allocation2] sm:$0xff]
    %v33 = vld [vmem:[#allocation2 + $0x8] sm:$0xff]
    %v34 = vld [vmem:[#allocation2 + $0x10] sm:$0xff]
    %v35 = vld [vmem:[#allocation2 + $0x18] sm:$0xff]
    %v36 = vld [vmem:[#allocation2 + $0x20] sm:$0xff]
    %v37 = vld [vmem:[#allocation2 + $0x28] sm:$0xff]
    %v38 = vld [vmem:[#allocation2 + $0x30] sm:$0xff]
    %v39 = vld [vmem:[#allocation2 + $0x38] sm:$0xff]
    %v40 = vld [vmem:[#allocation2 + $0x40] sm:$0xff]
    %v41 = vld [vmem:[#allocation2 + $0x48] sm:$0xff]
    %v42 = vld [vmem:[#allocation2 + $0x50] sm:$0xff]
    %v43 = vld [vmem:[#allocation2 + $0x58] sm:$0xff]
    %v44 = vld [vmem:[#allocation2 + $0x60] sm:$0xff]
    %v45 = vld [vmem:[#allocation2 + $0x68] sm:$0xff]
    %v46 = vld [vmem:[#allocation2 + $0x70] sm:$0xff]
    %v47 = vld [vmem:[#allocation2 + $0x78] sm:$0xff]
    %v48 = vld [vmem:[#allocation2 + $0x80] sm:$0xff]
    %v49 = vld [vmem:[#allocation2 + $0x88] sm:$0xff]
    %v50 = vld [vmem:[#allocation2 + $0x90] sm:$0xff]
    %v51 = vld [vmem:[#allocation2 + $0x98] sm:$0xff]
    %v52 = vld [vmem:[#allocation2 + $0xa0] sm:$0xff]
    %v53 = vld [vmem:[#allocation2 + $0xa8] sm:$0xff]
    %v54 = vld [vmem:[#allocation2 + $0xb0] sm:$0xff]
    %v55 = vld [vmem:[#allocation2 + $0xb8] sm:$0xff]
    %v56 = vld [vmem:[#allocation2 + $0xc0] sm:$0xff]
    %v57 = vld [vmem:[#allocation2 + $0xc8] sm:$0xff]
    %v58 = vld [vmem:[#allocation2 + $0xd0] sm:$0xff]
    %v59 = vld [vmem:[#allocation2 + $0xd8] sm:$0xff]
    %v60 = vld [vmem:[#allocation2 + $0xe0] sm:$0xff]
    %v61 = vld [vmem:[#allocation2 + $0xe8] sm:$0xff]
    %v62 = vld [vmem:[#allocation2 + $0xf0] sm:$0xff]
    %v63 = vld [vmem:[#allocation2 + $0xf8] sm:$0xff]
    %v64 = vld [vmem:[#allocation2 + $0x100] sm:$0xff]
    %v65 = vld [vmem:[#allocation2 + $0x108] sm:$0xff]
    %v66 = vld [vmem:[#allocation2 + $0x110] sm:$0xff]
    %v67 = vld [vmem:[#allocation2 + $0x118] sm:$0xff]
    %v68 = vld [vmem:[#allocation2 + $0x120] sm:$0xff]
    %v69 = vld [vmem:[#allocation2 + $0x128] sm:$0xff]
    %v70 = vld [vmem:[#allocation2 + $0x130] sm:$0xff]
    %v71 = vld [vmem:[#allocation2 + $0x138] sm:$0xff]
    %v72 = vld [vmem:[#allocation2 + $0x140] sm:$0xff]
    %v73 = vld [vmem:[#allocation2 + $0x148] sm:$0xff]
    %v74 = vld [vmem:[#allocation2 + $0x150] sm:$0xff]
    %v75 = vld [vmem:[#allocation2 + $0x158] sm:$0xff]
    %v76 = vld [vmem:[#allocation2 + $0x160] sm:$0xff]
    %v77 = vld [vmem:[#allocation2 + $0x168] sm:$0xff]
    %v78 = vld [vmem:[#allocation2 + $0x170] sm:$0xff]
    %v79 = vld [vmem:[#allocation2 + $0x178] sm:$0xff]
    %v80 = vld [vmem:[#allocation2 + $0x180] sm:$0xff]
    %v81 = vld [vmem:[#allocation2 + $0x188] sm:$0xff]
    %v82 = vld [vmem:[#allocation2 + $0x190] sm:$0xff]
    %v83 = vld [vmem:[#allocation2 + $0x198] sm:$0xff]
    %v84 = vld [vmem:[#allocation2 + $0x1a0] sm:$0xff]
    %v85 = vld [vmem:[#allocation2 + $0x1a8] sm:$0xff]
    %v86 = vld [vmem:[#allocation2 + $0x1b0] sm:$0xff]
    %v87 = vld [vmem:[#allocation2 + $0x1b8] sm:$0xff]
    %v88 = vld [vmem:[#allocation2 + $0x1c0] sm:$0xff]
    %v89 = vld [vmem:[#allocation2 + $0x1c8] sm:$0xff]
    %v90 = vld [vmem:[#allocation2 + $0x1d0] sm:$0xff]
    %v91 = vld [vmem:[#allocation2 + $0x1d8] sm:$0xff]
    %v92 = vld [vmem:[#allocation2 + $0x1e0] sm:$0xff]
    %v93 = vld [vmem:[#allocation2 + $0x1e8] sm:$0xff]
    %v94 = vld [vmem:[#allocation2 + $0x1f0] sm:$0xff]
    %v95 = vld [vmem:[#allocation2 + $0x1f8] sm:$0xff]
    %v96 = vld [vmem:[#allocation2 + $0x200] sm:$0xff]
    %v97 = vld [vmem:[#allocation2 + $0x208] sm:$0xff]
    %v98 = vld [vmem:[#allocation2 + $0x210] sm:$0xff]
    %v99 = vld [vmem:[#allocation2 + $0x218] sm:$0xff]
    %v100 = vld [vmem:[#allocation2 + $0x220] sm:$0xff]
    %v101 = vld [vmem:[#allocation2 + $0x228] sm:$0xff]
    %v102 = vld [vmem:[#allocation2 + $0x230] sm:$0xff]
    %v103 = vld [vmem:[#allocation2 + $0x238] sm:$0xff]
    %v104 = vld [vmem:[#allocation2 + $0x240] sm:$0xff]
    %v105 = vld [vmem:[#allocation2 + $0x248] sm:$0xff]
    %v106 = vld [vmem:[#allocation2 + $0x250] sm:$0xff]
    %v107 = vld [vmem:[#allocation2 + $0x258] sm:$0xff]
    %v108 = vld [vmem:[#allocation2 + $0x260] sm:$0xff]
    %v109 = vld [vmem:[#allocation2 + $0x268] sm:$0xff]
    %v110 = vld [vmem:[#allocation2 + $0x270] sm:$0xff]
    %v111 = vld [vmem:[#allocation2 + $0x278] sm:$0xff]
    %v128 = vunpack.c.l.b16 %v96
    %v129 = vunpack.c.h.b16 %v96
    %v130 = vunpack.c.l.b16 %v97
    %v131 = vunpack.c.h.b16 %v97
    %v132 = vunpack.c.l.b16 %v98
    %v133 = vunpack.c.h.b16 %v98
    %v134 = vunpack.c.l.b16 %v99
    %v135 = vunpack.c.h.b16 %v99
    %v136 = vunpack.c.l.b16 %v100
    %v137 = vunpack.c.h.b16 %v100
    %v138 = vunpack.c.l.b16 %v101
    %v139 = vunpack.c.h.b16 %v101
    %v140 = vunpack.c.l.b16 %v102
    %v141 = vunpack.c.h.b16 %v102
    %v142 = vunpack.c.l.b16 %v103
    %v143 = vunpack.c.h.b16 %v103
    %v144 = vunpack.c.l.b16 %v104
    %v145 = vunpack.c.h.b16 %v104
    %v146 = vunpack.c.l.b16 %v105
    %v147 = vunpack.c.h.b16 %v105
    %v148 = vunpack.c.l.b16 %v106
    %v149 = vunpack.c.h.b16 %v106
    %v150 = vunpack.c.l.b16 %v107
    %v151 = vunpack.c.h.b16 %v107
    %v152 = vunpack.c.l.b16 %v108
    %v153 = vunpack.c.h.b16 %v108
    %v154 = vunpack.c.l.b16 %v109
    %v155 = vunpack.c.h.b16 %v109
    %v156 = vunpack.c.l.b16 %v110
    %v157 = vunpack.c.h.b16 %v110
    %v158 = vunpack.c.l.b16 %v111
    %v159 = vunpack.c.h.b16 %v111
    %v160 = vpack.c.b16 %v130, %v128
    %v161 = vpack.c.b16 %v131, %v129
    %v162 = vpack.c.b16 %v134, %v132
    %v163 = vpack.c.b16 %v135, %v133
    %v164 = vpack.c.b16 %v138, %v136
    %v165 = vpack.c.b16 %v139, %v137
    %v166 = vpack.c.b16 %v142, %v140
    %v167 = vpack.c.b16 %v143, %v141
    %v168 = vpack.c.b16 %v146, %v144
    %v169 = vpack.c.b16 %v147, %v145
    %v170 = vpack.c.b16 %v150, %v148
    %v171 = vpack.c.b16 %v151, %v149
    %v172 = vpack.c.b16 %v154, %v152
    %v173 = vpack.c.b16 %v155, %v153
    %v174 = vpack.c.b16 %v158, %v156
    %v175 = vpack.c.b16 %v159, %v157
    %192 = vmatprep.subr.bf16.mxu0 %v175
    %193 = vmatpush1.bf16.msra.mxu0 %v174
    %194 = vmatprep.subr.bf16.mxu0 %v173
    %195 = vmatpush1.bf16.msra.mxu0 %v172
    %196 = vmatprep.subr.bf16.mxu0 %v171
    %197 = vmatpush1.bf16.msra.mxu0 %v170
    %198 = vmatprep.subr.bf16.mxu0 %v169
    %199 = vmatpush1.bf16.msra.mxu0 %v168
    %200 = vmatprep.subr.bf16.mxu0 %v167
    %201 = vmatpush1.bf16.msra.mxu0 %v166
    %202 = vmatprep.subr.bf16.mxu0 %v165
    %203 = vmatpush1.bf16.msra.mxu0 %v164
    %204 = vmatprep.subr.bf16.mxu0 %v163
    %205 = vmatpush1.bf16.msra.mxu0 %v162
    %206 = vmatprep.subr.bf16.mxu0 %v161
    %207 = vmatpush1.bf16.msra.mxu0 %v160
    %208 = vmatprep.subr.bf16.mxu0 0
    %209 = vmatpush2.bf16.msra.mxu0 0
    %210 = vmatprep.subr.bf16.mxu0 0
    %211 = vmatpush2.bf16.msra.mxu0 0
    %212 = vmatprep.subr.bf16.mxu0 0
    %213 = vmatpush2.bf16.msra.mxu0 0
    %214 = vmatprep.subr.bf16.mxu0 0
    %215 = vmatpush2.bf16.msra.mxu0 0
    %216 = vmatprep.subr.bf16.mxu0 0
    %217 = vmatpush2.bf16.msra.mxu0 0
    %218 = vmatprep.subr.bf16.mxu0 0
    %219 = vmatpush2.bf16.msra.mxu0 0
    %220 = vmatprep.subr.bf16.mxu0 0
    %221 = vmatpush2.bf16.msra.mxu0 0
    %222 = vmatprep.subr.bf16.mxu0 0
    %223 = vmatpush2.bf16.msra.mxu0 0
    %224 = vmatprep.mubr.bf16.mxu0 0
    %225 = vmatmul.mubr.bf16.gmra.mxu0 %v31
    %v226 = vpop.f32.mrf.mxu0
    %v227 = vadd.f32 0.0, %v226
    %v228 = vpop.f32.mrf.mxu0
    %v229 = vadd.f32 0.0, %v228
    %v230 = vpop.f32.mrf.mxu0
    %v231 = vpop.f32.mrf.mxu0
    %232 = vdwg.mxu0
    %v235 = vunpack.c.l.s4 1966171168
    %v236 = vunpack.c.0.s8 %v235
    %v237 = vlaneseq
    %v238 = vshrl.u32 %v237, 7
    %v239 = vsub.s32 %v236, %v238
    %v240 = vrot.slane %v30, %v239
    %v241 = vcombine.high %v240, %v240
    %v243 = vunpack.c.l.s4 1966171168
    %v244 = vunpack.c.0.s8 %v243
    %v245 = vlaneseq
    %v246 = vshrl.u32 %v245, 7
    %v247 = vsub.s32 %v244, %v246
    %v248 = vrot.slane %v240, %v247
    %v250 = vunpack.c.l.s4 1966171168
    %v251 = vunpack.c.0.s8 %v250
    %v252 = vlaneseq
    %v253 = vshrl.u32 %v252, 7
    %v254 = vsub.s32 %v251, %v253
    %v255 = vrot.slane %v241, %v254
    %v256 = vcombine.high %v248, %v248
    %v257 = vcombine.high %v255, %v255
    %v326 = vunpack.c.l.b16 %v32
    %v327 = vunpack.c.h.b16 %v32
    %v328 = vunpack.c.l.b16 %v33
    %v329 = vunpack.c.h.b16 %v33
    %v330 = vunpack.c.l.b16 %v34
    %v331 = vunpack.c.h.b16 %v34
    %v332 = vunpack.c.l.b16 %v35
    %v333 = vunpack.c.h.b16 %v35
    %v334 = vunpack.c.l.b16 %v36
    %v335 = vunpack.c.h.b16 %v36
    %v336 = vunpack.c.l.b16 %v37
    %v337 = vunpack.c.h.b16 %v37
    %v338 = vunpack.c.l.b16 %v38
    %v339 = vunpack.c.h.b16 %v38
    %v340 = vunpack.c.l.b16 %v39
    %v341 = vunpack.c.h.b16 %v39
    %v342 = vunpack.c.l.b16 %v40
    %v343 = vunpack.c.h.b16 %v40
    %v344 = vunpack.c.l.b16 %v41
    %v345 = vunpack.c.h.b16 %v41
    %v346 = vunpack.c.l.b16 %v42
    %v347 = vunpack.c.h.b16 %v42
    %v348 = vunpack.c.l.b16 %v43
    %v349 = vunpack.c.h.b16 %v43
    %v350 = vunpack.c.l.b16 %v44
    %v351 = vunpack.c.h.b16 %v44
    %v352 = vunpack.c.l.b16 %v45
    %v353 = vunpack.c.h.b16 %v45
    %v354 = vunpack.c.l.b16 %v46
    %v355 = vunpack.c.h.b16 %v46
    %v356 = vunpack.c.l.b16 %v47
    %v357 = vunpack.c.h.b16 %v47
    %v358 = vunpack.c.l.b16 %v48
    %v359 = vunpack.c.h.b16 %v48
    %v360 = vunpack.c.l.b16 %v49
    %v361 = vunpack.c.h.b16 %v49
    %v362 = vunpack.c.l.b16 %v50
    %v363 = vunpack.c.h.b16 %v50
    %v364 = vunpack.c.l.b16 %v51
    %v365 = vunpack.c.h.b16 %v51
    %v366 = vunpack.c.l.b16 %v52
    %v367 = vunpack.c.h.b16 %v52
    %v368 = vunpack.c.l.b16 %v53
    %v369 = vunpack.c.h.b16 %v53
    %v370 = vunpack.c.l.b16 %v54
    %v371 = vunpack.c.h.b16 %v54
    %v372 = vunpack.c.l.b16 %v55
    %v373 = vunpack.c.h.b16 %v55
    %v374 = vunpack.c.l.b16 %v56
    %v375 = vunpack.c.h.b16 %v56
    %v376 = vunpack.c.l.b16 %v57
    %v377 = vunpack.c.h.b16 %v57
    %v378 = vunpack.c.l.b16 %v58
    %v379 = vunpack.c.h.b16 %v58
    %v380 = vunpack.c.l.b16 %v59
    %v381 = vunpack.c.h.b16 %v59
    %v382 = vunpack.c.l.b16 %v60
    %v383 = vunpack.c.h.b16 %v60
    %v384 = vunpack.c.l.b16 %v61
    %v385 = vunpack.c.h.b16 %v61
    %v386 = vunpack.c.l.b16 %v62
    %v387 = vunpack.c.h.b16 %v62
    %v388 = vunpack.c.l.b16 %v63
    %v389 = vunpack.c.h.b16 %v63
    %v390 = vunpack.c.l.b16 %v64
    %v391 = vunpack.c.h.b16 %v64
    %v392 = vunpack.c.l.b16 %v65
    %v393 = vunpack.c.h.b16 %v65
    %v394 = vunpack.c.l.b16 %v66
    %v395 = vunpack.c.h.b16 %v66
    %v396 = vunpack.c.l.b16 %v67
    %v397 = vunpack.c.h.b16 %v67
    %v398 = vunpack.c.l.b16 %v68
    %v399 = vunpack.c.h.b16 %v68
    %v400 = vunpack.c.l.b16 %v69
    %v401 = vunpack.c.h.b16 %v69
    %v402 = vunpack.c.l.b16 %v70
    %v403 = vunpack.c.h.b16 %v70
    %v404 = vunpack.c.l.b16 %v71
    %v405 = vunpack.c.h.b16 %v71
    %v406 = vunpack.c.l.b16 %v72
    %v407 = vunpack.c.h.b16 %v72
    %v408 = vunpack.c.l.b16 %v73
    %v409 = vunpack.c.h.b16 %v73
    %v410 = vunpack.c.l.b16 %v74
    %v411 = vunpack.c.h.b16 %v74
    %v412 = vunpack.c.l.b16 %v75
    %v413 = vunpack.c.h.b16 %v75
    %v414 = vunpack.c.l.b16 %v76
    %v415 = vunpack.c.h.b16 %v76
    %v416 = vunpack.c.l.b16 %v77
    %v417 = vunpack.c.h.b16 %v77
    %v418 = vunpack.c.l.b16 %v78
    %v419 = vunpack.c.h.b16 %v78
    %v420 = vunpack.c.l.b16 %v79
    %v421 = vunpack.c.h.b16 %v79
    %v422 = vunpack.c.l.b16 %v80
    %v423 = vunpack.c.h.b16 %v80
    %v424 = vunpack.c.l.b16 %v81
    %v425 = vunpack.c.h.b16 %v81
    %v426 = vunpack.c.l.b16 %v82
    %v427 = vunpack.c.h.b16 %v82
    %v428 = vunpack.c.l.b16 %v83
    %v429 = vunpack.c.h.b16 %v83
    %v430 = vunpack.c.l.b16 %v84
    %v431 = vunpack.c.h.b16 %v84
    %v432 = vunpack.c.l.b16 %v85
    %v433 = vunpack.c.h.b16 %v85
    %v434 = vunpack.c.l.b16 %v86
    %v435 = vunpack.c.h.b16 %v86
    %v436 = vunpack.c.l.b16 %v87
    %v437 = vunpack.c.h.b16 %v87
    %v438 = vunpack.c.l.b16 %v88
    %v439 = vunpack.c.h.b16 %v88
    %v440 = vunpack.c.l.b16 %v89
    %v441 = vunpack.c.h.b16 %v89
    %v442 = vunpack.c.l.b16 %v90
    %v443 = vunpack.c.h.b16 %v90
    %v444 = vunpack.c.l.b16 %v91
    %v445 = vunpack.c.h.b16 %v91
    %v446 = vunpack.c.l.b16 %v92
    %v447 = vunpack.c.h.b16 %v92
    %v448 = vunpack.c.l.b16 %v93
    %v449 = vunpack.c.h.b16 %v93
    %v450 = vunpack.c.l.b16 %v94
    %v451 = vunpack.c.h.b16 %v94
    %v452 = vunpack.c.l.b16 %v95
    %v453 = vunpack.c.h.b16 %v95
    %v454 = vpack.c.b16 %v328, %v326
    %v455 = vpack.c.b16 %v329, %v327
    %v456 = vpack.c.b16 %v332, %v330
    %v457 = vpack.c.b16 %v333, %v331
    %v458 = vpack.c.b16 %v336, %v334
    %v459 = vpack.c.b16 %v337, %v335
    %v460 = vpack.c.b16 %v340, %v338
    %v461 = vpack.c.b16 %v341, %v339
    %v462 = vpack.c.b16 %v344, %v342
    %v463 = vpack.c.b16 %v345, %v343
    %v464 = vpack.c.b16 %v348, %v346
    %v465 = vpack.c.b16 %v349, %v347
    %v466 = vpack.c.b16 %v352, %v350
    %v467 = vpack.c.b16 %v353, %v351
    %v468 = vpack.c.b16 %v356, %v354
    %v469 = vpack.c.b16 %v357, %v355
    %v470 = vpack.c.b16 %v360, %v358
    %v471 = vpack.c.b16 %v361, %v359
    %v472 = vpack.c.b16 %v364, %v362
    %v473 = vpack.c.b16 %v365, %v363
    %v474 = vpack.c.b16 %v368, %v366
    %v475 = vpack.c.b16 %v369, %v367
    %v476 = vpack.c.b16 %v372, %v370
    %v477 = vpack.c.b16 %v373, %v371
    %v478 = vpack.c.b16 %v376, %v374
    %v479 = vpack.c.b16 %v377, %v375
    %v480 = vpack.c.b16 %v380, %v378
    %v481 = vpack.c.b16 %v381, %v379
    %v482 = vpack.c.b16 %v384, %v382
    %v483 = vpack.c.b16 %v385, %v383
    %v484 = vpack.c.b16 %v388, %v386
    %v485 = vpack.c.b16 %v389, %v387
    %v486 = vpack.c.b16 %v392, %v390
    %v487 = vpack.c.b16 %v393, %v391
    %v488 = vpack.c.b16 %v396, %v394
    %v489 = vpack.c.b16 %v397, %v395
    %v490 = vpack.c.b16 %v400, %v398
    %v491 = vpack.c.b16 %v401, %v399
    %v492 = vpack.c.b16 %v404, %v402
    %v493 = vpack.c.b16 %v405, %v403
    %v494 = vpack.c.b16 %v408, %v406
    %v495 = vpack.c.b16 %v409, %v407
    %v496 = vpack.c.b16 %v412, %v410
    %v497 = vpack.c.b16 %v413, %v411
    %v498 = vpack.c.b16 %v416, %v414
    %v499 = vpack.c.b16 %v417, %v415
    %v500 = vpack.c.b16 %v420, %v418
    %v501 = vpack.c.b16 %v421, %v419
    %v502 = vpack.c.b16 %v424, %v422
    %v503 = vpack.c.b16 %v425, %v423
    %v504 = vpack.c.b16 %v428, %v426
    %v505 = vpack.c.b16 %v429, %v427
    %v506 = vpack.c.b16 %v432, %v430
    %v507 = vpack.c.b16 %v433, %v431
    %v508 = vpack.c.b16 %v436, %v434
    %v509 = vpack.c.b16 %v437, %v435
    %v510 = vpack.c.b16 %v440, %v438
    %v511 = vpack.c.b16 %v441, %v439
    %v512 = vpack.c.b16 %v444, %v442
    %v513 = vpack.c.b16 %v445, %v443
    %v514 = vpack.c.b16 %v448, %v446
    %v515 = vpack.c.b16 %v449, %v447
    %v516 = vpack.c.b16 %v452, %v450
    %v517 = vpack.c.b16 %v453, %v451
    %582 = vmatprep.subr.bf16.mxu0 %v469
    %583 = vmatpush1.bf16.msra.mxu0 %v468
    %584 = vmatprep.subr.bf16.mxu0 %v467
    %585 = vmatpush1.bf16.msra.mxu0 %v466
    %586 = vmatprep.subr.bf16.mxu0 %v465
    %587 = vmatpush1.bf16.msra.mxu0 %v464
    %588 = vmatprep.subr.bf16.mxu0 %v463
    %589 = vmatpush1.bf16.msra.mxu0 %v462
    %590 = vmatprep.subr.bf16.mxu0 %v461
    %591 = vmatpush1.bf16.msra.mxu0 %v460
    %592 = vmatprep.subr.bf16.mxu0 %v459
    %593 = vmatpush1.bf16.msra.mxu0 %v458
    %594 = vmatprep.subr.bf16.mxu0 %v457
    %595 = vmatpush1.bf16.msra.mxu0 %v456
    %596 = vmatprep.subr.bf16.mxu0 %v455
    %597 = vmatpush1.bf16.msra.mxu0 %v454
    %598 = vmatprep.subr.bf16.mxu0 %v485
    %599 = vmatpush2.bf16.msra.mxu0 %v484
    %600 = vmatprep.subr.bf16.mxu0 %v483
    %601 = vmatpush2.bf16.msra.mxu0 %v482
    %602 = vmatprep.subr.bf16.mxu0 %v481
    %603 = vmatpush2.bf16.msra.mxu0 %v480
    %604 = vmatprep.subr.bf16.mxu0 %v479
    %605 = vmatpush2.bf16.msra.mxu0 %v478
    %606 = vmatprep.subr.bf16.mxu0 %v477
    %607 = vmatpush2.bf16.msra.mxu0 %v476
    %608 = vmatprep.subr.bf16.mxu0 %v475
    %609 = vmatpush2.bf16.msra.mxu0 %v474
    %610 = vmatprep.subr.bf16.mxu0 %v473
    %611 = vmatpush2.bf16.msra.mxu0 %v472
    %612 = vmatprep.subr.bf16.mxu0 %v471
    %613 = vmatpush2.bf16.msra.mxu0 %v470
    %614 = vmatprep.mubr.bf16.mxu0 %v255
    %615 = vmatmul.mubr.bf16.gmra.mxu0 %v248
    %v616 = vpop.f32.mrf.mxu0
    %v617 = vadd.f32 %v227, %v616
    %v618 = vpop.f32.mrf.mxu0
    %v619 = vadd.f32 %v229, %v618
    %v620 = vpop.f32.mrf.mxu0
    %v621 = vpop.f32.mrf.mxu0
    %622 = vdwg.mxu0
    %623 = vmatprep.subr.bf16.mxu0 %v501
    %624 = vmatpush1.bf16.msra.mxu0 %v500
    %625 = vmatprep.subr.bf16.mxu0 %v499
    %626 = vmatpush1.bf16.msra.mxu0 %v498
    %627 = vmatprep.subr.bf16.mxu0 %v497
    %628 = vmatpush1.bf16.msra.mxu0 %v496
    %629 = vmatprep.subr.bf16.mxu0 %v495
    %630 = vmatpush1.bf16.msra.mxu0 %v494
    %631 = vmatprep.subr.bf16.mxu0 %v493
    %632 = vmatpush1.bf16.msra.mxu0 %v492
    %633 = vmatprep.subr.bf16.mxu0 %v491
    %634 = vmatpush1.bf16.msra.mxu0 %v490
    %635 = vmatprep.subr.bf16.mxu0 %v489
    %636 = vmatpush1.bf16.msra.mxu0 %v488
    %637 = vmatprep.subr.bf16.mxu0 %v487
    %638 = vmatpush1.bf16.msra.mxu0 %v486
    %639 = vmatprep.subr.bf16.mxu0 %v517
    %640 = vmatpush2.bf16.msra.mxu0 %v516
    %641 = vmatprep.subr.bf16.mxu0 %v515
    %642 = vmatpush2.bf16.msra.mxu0 %v514
    %643 = vmatprep.subr.bf16.mxu0 %v513
    %644 = vmatpush2.bf16.msra.mxu0 %v512
    %645 = vmatprep.subr.bf16.mxu0 %v511
    %646 = vmatpush2.bf16.msra.mxu0 %v510
    %647 = vmatprep.subr.bf16.mxu0 %v509
    %648 = vmatpush2.bf16.msra.mxu0 %v508
    %649 = vmatprep.subr.bf16.mxu0 %v507
    %650 = vmatpush2.bf16.msra.mxu0 %v506
    %651 = vmatprep.subr.bf16.mxu0 %v505
    %652 = vmatpush2.bf16.msra.mxu0 %v504
    %653 = vmatprep.subr.bf16.mxu0 %v503
    %654 = vmatpush2.bf16.msra.mxu0 %v502
    %655 = vmatprep.mubr.bf16.mxu0 %v257
    %656 = vmatmul.mubr.bf16.gmra.mxu0 %v256
    %v657 = vpop.f32.mrf.mxu0
    %v658 = vadd.f32 %v617, %v657
    %v659 = vpop.f32.mrf.mxu0
    %v660 = vadd.f32 %v619, %v659
    %v661 = vpop.f32.mrf.mxu0
    %v662 = vpop.f32.mrf.mxu0
    %663 = vdwg.mxu0
    %v664 = vmax.f32 %v658, 0.0
    %v665 = vmax.f32 %v660, 0.0
    %v666 = vpack.c.bf16 %v664, %v664
    %v667 = vpack.c.bf16 %v665, %v665
    %v668 = vld [vmem:[#allocation2 + $0x280] sm:$0xff]
    %v669 = vld [vmem:[#allocation2 + $0x288] sm:$0xff]
    %v670 = vld [vmem:[#allocation2 + $0x290] sm:$0xff]
    %v671 = vld [vmem:[#allocation2 + $0x298] sm:$0xff]
    %v672 = vld [vmem:[#allocation2 + $0x2a0] sm:$0xff]
    %v673 = vld [vmem:[#allocation2 + $0x2a8] sm:$0xff]
    %v674 = vld [vmem:[#allocation2 + $0x2b0] sm:$0xff]
    %v675 = vld [vmem:[#allocation2 + $0x2b8] sm:$0xff]
    %v676 = vld [vmem:[#allocation2 + $0x2c0] sm:$0xff]
    %v677 = vld [vmem:[#allocation2 + $0x2c8] sm:$0xff]
    %v678 = vld [vmem:[#allocation2 + $0x2d0] sm:$0xff]
    %v679 = vld [vmem:[#allocation2 + $0x2d8] sm:$0xff]
    %v680 = vld [vmem:[#allocation2 + $0x2e0] sm:$0xff]
    %v681 = vld [vmem:[#allocation2 + $0x2e8] sm:$0xff]
    %v682 = vld [vmem:[#allocation2 + $0x2f0] sm:$0xff]
    %v683 = vld [vmem:[#allocation2 + $0x2f8] sm:$0xff]
    %v684 = vld [vmem:[#allocation2 + $0x300] sm:$0xff]
    %v685 = vld [vmem:[#allocation2 + $0x308] sm:$0xff]
    %v686 = vld [vmem:[#allocation2 + $0x310] sm:$0xff]
    %v687 = vld [vmem:[#allocation2 + $0x318] sm:$0xff]
    %v688 = vld [vmem:[#allocation2 + $0x320] sm:$0xff]
    %v689 = vld [vmem:[#allocation2 + $0x328] sm:$0xff]
    %v690 = vld [vmem:[#allocation2 + $0x330] sm:$0xff]
    %v691 = vld [vmem:[#allocation2 + $0x338] sm:$0xff]
    %v692 = vld [vmem:[#allocation2 + $0x340] sm:$0xff]
    %v693 = vld [vmem:[#allocation2 + $0x348] sm:$0xff]
    %v694 = vld [vmem:[#allocation2 + $0x350] sm:$0xff]
    %v695 = vld [vmem:[#allocation2 + $0x358] sm:$0xff]
    %v696 = vld [vmem:[#allocation2 + $0x360] sm:$0xff]
    %v697 = vld [vmem:[#allocation2 + $0x368] sm:$0xff]
    %v698 = vld [vmem:[#allocation2 + $0x370] sm:$0xff]
    %v699 = vld [vmem:[#allocation2 + $0x378] sm:$0xff]
    %v732 = vunpack.c.l.b16 %v668
    %v733 = vunpack.c.h.b16 %v668
    %v734 = vunpack.c.l.b16 %v669
    %v735 = vunpack.c.h.b16 %v669
    %v736 = vunpack.c.l.b16 %v670
    %v737 = vunpack.c.h.b16 %v670
    %v738 = vunpack.c.l.b16 %v671
    %v739 = vunpack.c.h.b16 %v671
    %v740 = vunpack.c.l.b16 %v672
    %v741 = vunpack.c.h.b16 %v672
    %v742 = vunpack.c.l.b16 %v673
    %v743 = vunpack.c.h.b16 %v673
    %v744 = vunpack.c.l.b16 %v674
    %v745 = vunpack.c.h.b16 %v674
    %v746 = vunpack.c.l.b16 %v675
    %v747 = vunpack.c.h.b16 %v675
    %v748 = vunpack.c.l.b16 %v676
    %v749 = vunpack.c.h.b16 %v676
    %v750 = vunpack.c.l.b16 %v677
    %v751 = vunpack.c.h.b16 %v677
    %v752 = vunpack.c.l.b16 %v678
    %v753 = vunpack.c.h.b16 %v678
    %v754 = vunpack.c.l.b16 %v679
    %v755 = vunpack.c.h.b16 %v679
    %v756 = vunpack.c.l.b16 %v680
    %v757 = vunpack.c.h.b16 %v680
    %v758 = vunpack.c.l.b16 %v681
    %v759 = vunpack.c.h.b16 %v681
    %v760 = vunpack.c.l.b16 %v682
    %v761 = vunpack.c.h.b16 %v682
    %v762 = vunpack.c.l.b16 %v683
    %v763 = vunpack.c.h.b16 %v683
    %v764 = vunpack.c.l.b16 %v684
    %v765 = vunpack.c.h.b16 %v684
    %v766 = vunpack.c.l.b16 %v685
    %v767 = vunpack.c.h.b16 %v685
    %v768 = vunpack.c.l.b16 %v686
    %v769 = vunpack.c.h.b16 %v686
    %v770 = vunpack.c.l.b16 %v687
    %v771 = vunpack.c.h.b16 %v687
    %v772 = vunpack.c.l.b16 %v688
    %v773 = vunpack.c.h.b16 %v688
    %v774 = vunpack.c.l.b16 %v689
    %v775 = vunpack.c.h.b16 %v689
    %v776 = vunpack.c.l.b16 %v690
    %v777 = vunpack.c.h.b16 %v690
    %v778 = vunpack.c.l.b16 %v691
    %v779 = vunpack.c.h.b16 %v691
    %v780 = vunpack.c.l.b16 %v692
    %v781 = vunpack.c.h.b16 %v692
    %v782 = vunpack.c.l.b16 %v693
    %v783 = vunpack.c.h.b16 %v693
    %v784 = vunpack.c.l.b16 %v694
    %v785 = vunpack.c.h.b16 %v694
    %v786 = vunpack.c.l.b16 %v695
    %v787 = vunpack.c.h.b16 %v695
    %v788 = vunpack.c.l.b16 %v696
    %v789 = vunpack.c.h.b16 %v696
    %v790 = vunpack.c.l.b16 %v697
    %v791 = vunpack.c.h.b16 %v697
    %v792 = vunpack.c.l.b16 %v698
    %v793 = vunpack.c.h.b16 %v698
    %v794 = vunpack.c.l.b16 %v699
    %v795 = vunpack.c.h.b16 %v699
    %v796 = vpack.c.b16 %v734, %v732
    %v797 = vpack.c.b16 %v735, %v733
    %v798 = vpack.c.b16 %v738, %v736
    %v799 = vpack.c.b16 %v739, %v737
    %v800 = vpack.c.b16 %v742, %v740
    %v801 = vpack.c.b16 %v743, %v741
    %v802 = vpack.c.b16 %v746, %v744
    %v803 = vpack.c.b16 %v747, %v745
    %v804 = vpack.c.b16 %v750, %v748
    %v805 = vpack.c.b16 %v751, %v749
    %v806 = vpack.c.b16 %v754, %v752
    %v807 = vpack.c.b16 %v755, %v753
    %v808 = vpack.c.b16 %v758, %v756
    %v809 = vpack.c.b16 %v759, %v757
    %v810 = vpack.c.b16 %v762, %v760
    %v811 = vpack.c.b16 %v763, %v761
    %v812 = vpack.c.b16 %v766, %v764
    %v813 = vpack.c.b16 %v767, %v765
    %v814 = vpack.c.b16 %v770, %v768
    %v815 = vpack.c.b16 %v771, %v769
    %v816 = vpack.c.b16 %v774, %v772
    %v817 = vpack.c.b16 %v775, %v773
    %v818 = vpack.c.b16 %v778, %v776
    %v819 = vpack.c.b16 %v779, %v777
    %v820 = vpack.c.b16 %v782, %v780
    %v821 = vpack.c.b16 %v783, %v781
    %v822 = vpack.c.b16 %v786, %v784
    %v823 = vpack.c.b16 %v787, %v785
    %v824 = vpack.c.b16 %v790, %v788
    %v825 = vpack.c.b16 %v791, %v789
    %v826 = vpack.c.b16 %v794, %v792
    %v827 = vpack.c.b16 %v795, %v793
    %860 = vmatprep.subr.bf16.mxu0 %v811
    %861 = vmatpush1.bf16.msra.mxu0 %v810
    %862 = vmatprep.subr.bf16.mxu0 %v809
    %863 = vmatpush1.bf16.msra.mxu0 %v808
    %864 = vmatprep.subr.bf16.mxu0 %v807
    %865 = vmatpush1.bf16.msra.mxu0 %v806
    %866 = vmatprep.subr.bf16.mxu0 %v805
    %867 = vmatpush1.bf16.msra.mxu0 %v804
    %868 = vmatprep.subr.bf16.mxu0 %v803
    %869 = vmatpush1.bf16.msra.mxu0 %v802
    %870 = vmatprep.subr.bf16.mxu0 %v801
    %871 = vmatpush1.bf16.msra.mxu0 %v800
    %872 = vmatprep.subr.bf16.mxu0 %v799
    %873 = vmatpush1.bf16.msra.mxu0 %v798
    %874 = vmatprep.subr.bf16.mxu0 %v797
    %875 = vmatpush1.bf16.msra.mxu0 %v796
    %876 = vmatprep.subr.bf16.mxu0 %v827
    %877 = vmatpush2.bf16.msra.mxu0 %v826
    %878 = vmatprep.subr.bf16.mxu0 %v825
    %879 = vmatpush2.bf16.msra.mxu0 %v824
    %880 = vmatprep.subr.bf16.mxu0 %v823
    %881 = vmatpush2.bf16.msra.mxu0 %v822
    %882 = vmatprep.subr.bf16.mxu0 %v821
    %883 = vmatpush2.bf16.msra.mxu0 %v820
    %884 = vmatprep.subr.bf16.mxu0 %v819
    %885 = vmatpush2.bf16.msra.mxu0 %v818
    %886 = vmatprep.subr.bf16.mxu0 %v817
    %887 = vmatpush2.bf16.msra.mxu0 %v816
    %888 = vmatprep.subr.bf16.mxu0 %v815
    %889 = vmatpush2.bf16.msra.mxu0 %v814
    %890 = vmatprep.subr.bf16.mxu0 %v813
    %891 = vmatpush2.bf16.msra.mxu0 %v812
    %892 = vmatprep.mubr.bf16.mxu0 %v667
    %893 = vmatmul.mubr.bf16.gmra.mxu0 %v666
    %v894 = vpop.f32.mrf.mxu0
    %v895 = vadd.f32 0.0, %v894
    %v896 = vpop.f32.mrf.mxu0
    %v897 = vadd.f32 0.0, %v896
    %v898 = vpop.f32.mrf.mxu0
    %v899 = vpop.f32.mrf.mxu0
    %900 = vdwg.mxu0
    %v901 = vmax.f32 %v895, 0.0
    %v902 = vmax.f32 %v897, 0.0
    %v903 = vpack.c.bf16 %v901, %v901
    %v904 = vpack.c.bf16 %v902, %v902
    %v905 = vld [vmem:[#allocation2 + $0x380] sm:$0xf]
    %v906 = vld [vmem:[#allocation2 + $0x388] sm:$0xf]
    %v907 = vld [vmem:[#allocation2 + $0x390] sm:$0xf]
    %v908 = vld [vmem:[#allocation2 + $0x398] sm:$0xf]
    %v909 = vld [vmem:[#allocation2 + $0x3a0] sm:$0xf]
    %v910 = vld [vmem:[#allocation2 + $0x3a8] sm:$0xf]
    %v911 = vld [vmem:[#allocation2 + $0x3b0] sm:$0xf]
    %v912 = vld [vmem:[#allocation2 + $0x3b8] sm:$0xf]
    %v913 = vld [vmem:[#allocation2 + $0x3c0] sm:$0xf]
    %v914 = vld [vmem:[#allocation2 + $0x3c8] sm:$0xf]
    %v915 = vld [vmem:[#allocation2 + $0x3d0] sm:$0xf]
    %v916 = vld [vmem:[#allocation2 + $0x3d8] sm:$0xf]
    %v917 = vld [vmem:[#allocation2 + $0x3e0] sm:$0xf]
    %v918 = vld [vmem:[#allocation2 + $0x3e8] sm:$0xf]
    %v919 = vld [vmem:[#allocation2 + $0x3f0] sm:$0xf]
    %v920 = vld [vmem:[#allocation2 + $0x3f8] sm:$0xf]
    %v921 = vld [vmem:[#allocation2 + $0x400] sm:$0xf]
    %v922 = vld [vmem:[#allocation2 + $0x408] sm:$0xf]
    %v923 = vld [vmem:[#allocation2 + $0x410] sm:$0xf]
    %v924 = vld [vmem:[#allocation2 + $0x418] sm:$0xf]
    %v925 = vld [vmem:[#allocation2 + $0x420] sm:$0xf]
    %v926 = vld [vmem:[#allocation2 + $0x428] sm:$0xf]
    %v927 = vld [vmem:[#allocation2 + $0x430] sm:$0xf]
    %v928 = vld [vmem:[#allocation2 + $0x438] sm:$0xf]
    %v929 = vld [vmem:[#allocation2 + $0x440] sm:$0xf]
    %v930 = vld [vmem:[#allocation2 + $0x448] sm:$0xf]
    %v931 = vld [vmem:[#allocation2 + $0x450] sm:$0xf]
    %v932 = vld [vmem:[#allocation2 + $0x458] sm:$0xf]
    %v933 = vld [vmem:[#allocation2 + $0x460] sm:$0xf]
    %v934 = vld [vmem:[#allocation2 + $0x468] sm:$0xf]
    %v935 = vld [vmem:[#allocation2 + $0x470] sm:$0xf]
    %v936 = vld [vmem:[#allocation2 + $0x478] sm:$0xf]
    %v969 = vunpack.c.l.b16 %v905
    %v970 = vunpack.c.l.b16 %v906
    %v971 = vunpack.c.l.b16 %v907
    %v972 = vunpack.c.l.b16 %v908
    %v973 = vunpack.c.l.b16 %v909
    %v974 = vunpack.c.l.b16 %v910
    %v975 = vunpack.c.l.b16 %v911
    %v976 = vunpack.c.l.b16 %v912
    %v977 = vunpack.c.l.b16 %v913
    %v978 = vunpack.c.l.b16 %v914
    %v979 = vunpack.c.l.b16 %v915
    %v980 = vunpack.c.l.b16 %v916
    %v981 = vunpack.c.l.b16 %v917
    %v982 = vunpack.c.l.b16 %v918
    %v983 = vunpack.c.l.b16 %v919
    %v984 = vunpack.c.l.b16 %v920
    %v985 = vunpack.c.l.b16 %v921
    %v986 = vunpack.c.l.b16 %v922
    %v987 = vunpack.c.l.b16 %v923
    %v988 = vunpack.c.l.b16 %v924
    %v989 = vunpack.c.l.b16 %v925
    %v990 = vunpack.c.l.b16 %v926
    %v991 = vunpack.c.l.b16 %v927
    %v992 = vunpack.c.l.b16 %v928
    %v993 = vunpack.c.l.b16 %v929
    %v994 = vunpack.c.l.b16 %v930
    %v995 = vunpack.c.l.b16 %v931
    %v996 = vunpack.c.l.b16 %v932
    %v997 = vunpack.c.l.b16 %v933
    %v998 = vunpack.c.l.b16 %v934
    %v999 = vunpack.c.l.b16 %v935
    %v1000 = vunpack.c.l.b16 %v936
    %v1001 = vpack.c.b16 %v970, %v969
    %v1002 = vpack.c.b16 %v972, %v971
    %v1003 = vpack.c.b16 %v974, %v973
    %v1004 = vpack.c.b16 %v976, %v975
    %v1005 = vpack.c.b16 %v978, %v977
    %v1006 = vpack.c.b16 %v980, %v979
    %v1007 = vpack.c.b16 %v982, %v981
    %v1008 = vpack.c.b16 %v984, %v983
    %v1009 = vpack.c.b16 %v986, %v985
    %v1010 = vpack.c.b16 %v988, %v987
    %v1011 = vpack.c.b16 %v990, %v989
    %v1012 = vpack.c.b16 %v992, %v991
    %v1013 = vpack.c.b16 %v994, %v993
    %v1014 = vpack.c.b16 %v996, %v995
    %v1015 = vpack.c.b16 %v998, %v997
    %v1016 = vpack.c.b16 %v1000, %v999
    %1033 = vmatprep.subr.bf16.mxu0 0
    %1034 = vmatpush1.bf16.msra.mxu0 %v1008
    %1035 = vmatprep.subr.bf16.mxu0 0
    %1036 = vmatpush1.bf16.msra.mxu0 %v1007
    %1037 = vmatprep.subr.bf16.mxu0 0
    %1038 = vmatpush1.bf16.msra.mxu0 %v1006
    %1039 = vmatprep.subr.bf16.mxu0 0
    %1040 = vmatpush1.bf16.msra.mxu0 %v1005
    %1041 = vmatprep.subr.bf16.mxu0 0
    %1042 = vmatpush1.bf16.msra.mxu0 %v1004
    %1043 = vmatprep.subr.bf16.mxu0 0
    %1044 = vmatpush1.bf16.msra.mxu0 %v1003
    %1045 = vmatprep.subr.bf16.mxu0 0
    %1046 = vmatpush1.bf16.msra.mxu0 %v1002
    %1047 = vmatprep.subr.bf16.mxu0 0
    %1048 = vmatpush1.bf16.msra.mxu0 %v1001
    %1049 = vmatprep.subr.bf16.mxu0 0
    %1050 = vmatpush2.bf16.msra.mxu0 %v1016
    %1051 = vmatprep.subr.bf16.mxu0 0
    %1052 = vmatpush2.bf16.msra.mxu0 %v1015
    %1053 = vmatprep.subr.bf16.mxu0 0
    %1054 = vmatpush2.bf16.msra.mxu0 %v1014
    %1055 = vmatprep.subr.bf16.mxu0 0
    %1056 = vmatpush2.bf16.msra.mxu0 %v1013
    %1057 = vmatprep.subr.bf16.mxu0 0
    %1058 = vmatpush2.bf16.msra.mxu0 %v1012
    %1059 = vmatprep.subr.bf16.mxu0 0
    %1060 = vmatpush2.bf16.msra.mxu0 %v1011
    %1061 = vmatprep.subr.bf16.mxu0 0
    %1062 = vmatpush2.bf16.msra.mxu0 %v1010
    %1063 = vmatprep.subr.bf16.mxu0 0
    %1064 = vmatpush2.bf16.msra.mxu0 %v1009
    %1065 = vmatprep.mubr.bf16.mxu0 %v904
    %1066 = vmatmul.mubr.bf16.gmra.mxu0 %v903
    %v1067 = vpop.f32.mrf.mxu0
    %v1068 = vadd.f32 0.0, %v1067
    %v1069 = vpop.f32.mrf.mxu0
    %v1070 = vpop.f32.mrf.mxu0
    %v1071 = vpop.f32.mrf.mxu0
    %1072 = vdwg.mxu0
    %v1073 = vmax.f32 %v1068, 0.0
    %v1074 = vpack.c.bf16 %v1073, %v1073
    %v1075 = vld [vmem:[#allocation2 + $0x384] sm:$0xf]
    %v1076 = vld [vmem:[#allocation2 + $0x38c] sm:$0xf]
    %v1077 = vld [vmem:[#allocation2 + $0x394] sm:$0xf]
    %v1078 = vld [vmem:[#allocation2 + $0x39c] sm:$0xf]
    %v1079 = vld [vmem:[#allocation2 + $0x3a4] sm:$0xf]
    %v1080 = vld [vmem:[#allocation2 + $0x3ac] sm:$0xf]
    %v1081 = vld [vmem:[#allocation2 + $0x3b4] sm:$0xf]
    %v1082 = vld [vmem:[#allocation2 + $0x3bc] sm:$0xf]
    %v1083 = vld [vmem:[#allocation2 + $0x3c4] sm:$0xf]
    %v1084 = vld [vmem:[#allocation2 + $0x3cc] sm:$0xf]
    %v1085 = vld [vmem:[#allocation2 + $0x3d4] sm:$0xf]
    %v1086 = vld [vmem:[#allocation2 + $0x3dc] sm:$0xf]
    %v1087 = vld [vmem:[#allocation2 + $0x3e4] sm:$0xf]
    %v1088 = vld [vmem:[#allocation2 + $0x3ec] sm:$0xf]
    %v1089 = vld [vmem:[#allocation2 + $0x3f4] sm:$0xf]
    %v1090 = vld [vmem:[#allocation2 + $0x3fc] sm:$0xf]
    %v1107 = vunpack.c.l.b16 %v1075
    %v1108 = vunpack.c.l.b16 %v1076
    %v1109 = vunpack.c.l.b16 %v1077
    %v1110 = vunpack.c.l.b16 %v1078
    %v1111 = vunpack.c.l.b16 %v1079
    %v1112 = vunpack.c.l.b16 %v1080
    %v1113 = vunpack.c.l.b16 %v1081
    %v1114 = vunpack.c.l.b16 %v1082
    %v1115 = vunpack.c.l.b16 %v1083
    %v1116 = vunpack.c.l.b16 %v1084
    %v1117 = vunpack.c.l.b16 %v1085
    %v1118 = vunpack.c.l.b16 %v1086
    %v1119 = vunpack.c.l.b16 %v1087
    %v1120 = vunpack.c.l.b16 %v1088
    %v1121 = vunpack.c.l.b16 %v1089
    %v1122 = vunpack.c.l.b16 %v1090
    %v1123 = vpack.c.b16 %v1108, %v1107
    %v1124 = vpack.c.b16 %v1110, %v1109
    %v1125 = vpack.c.b16 %v1112, %v1111
    %v1126 = vpack.c.b16 %v1114, %v1113
    %v1127 = vpack.c.b16 %v1116, %v1115
    %v1128 = vpack.c.b16 %v1118, %v1117
    %v1129 = vpack.c.b16 %v1120, %v1119
    %v1130 = vpack.c.b16 %v1122, %v1121
    %1139 = vmatprep.subr.bf16.mxu0 0
    %1140 = vmatpush1.bf16.msra.mxu0 %v1130
    %1141 = vmatprep.subr.bf16.mxu0 0
    %1142 = vmatpush1.bf16.msra.mxu0 %v1129
    %1143 = vmatprep.subr.bf16.mxu0 0
    %1144 = vmatpush1.bf16.msra.mxu0 %v1128
    %1145 = vmatprep.subr.bf16.mxu0 0
    %1146 = vmatpush1.bf16.msra.mxu0 %v1127
    %1147 = vmatprep.subr.bf16.mxu0 0
    %1148 = vmatpush1.bf16.msra.mxu0 %v1126
    %1149 = vmatprep.subr.bf16.mxu0 0
    %1150 = vmatpush1.bf16.msra.mxu0 %v1125
    %1151 = vmatprep.subr.bf16.mxu0 0
    %1152 = vmatpush1.bf16.msra.mxu0 %v1124
    %1153 = vmatprep.subr.bf16.mxu0 0
    %1154 = vmatpush1.bf16.msra.mxu0 %v1123
    %1155 = vmatprep.subr.bf16.mxu0 0
    %1156 = vmatpush2.bf16.msra.mxu0 0
    %1157 = vmatprep.subr.bf16.mxu0 0
    %1158 = vmatpush2.bf16.msra.mxu0 0
    %1159 = vmatprep.subr.bf16.mxu0 0
    %1160 = vmatpush2.bf16.msra.mxu0 0
    %1161 = vmatprep.subr.bf16.mxu0 0
    %1162 = vmatpush2.bf16.msra.mxu0 0
    %1163 = vmatprep.subr.bf16.mxu0 0
    %1164 = vmatpush2.bf16.msra.mxu0 0
    %1165 = vmatprep.subr.bf16.mxu0 0
    %1166 = vmatpush2.bf16.msra.mxu0 0
    %1167 = vmatprep.subr.bf16.mxu0 0
    %1168 = vmatpush2.bf16.msra.mxu0 0
    %1169 = vmatprep.subr.bf16.mxu0 0
    %1170 = vmatpush2.bf16.msra.mxu0 0
    %1171 = vmatprep.mubr.bf16.mxu0 0
    %1172 = vmatmul.mubr.bf16.gmra.mxu0 %v1074
    %v1173 = vpop.f32.mrf.mxu0
    %v1174 = vadd.f32 0.0, %v1173
    %v1175 = vpop.f32.mrf.mxu0
    %v1176 = vpop.f32.mrf.mxu0
    %v1177 = vpop.f32.mrf.mxu0
    %1178 = vdwg.mxu0
    %v1179 = vtanh.pop %v1174
    %1180 = vst [vmem:[#allocation5] sm:$0x1] %v1179
    // Predicated region
    $region18: #{forward.1} parent=1 // pred_check
      _
    $region19: #{forward.1} parent=1 // pred_check_branch
      %1182 = sbr.rel (0) target = $region21
    $region20: #{forward.1} parent=1 // pred_region
      %s1184 = ssub.s32 16, 16
      %1185 = vsyncadd [#allocation4], %s1184
      %s1187 = sshll.u32 [#allocation5], 4
      %s1188 = int_to_ptr.vmem [resolvable:$true] %s1187
      %1190 = dma.vmem_to_hbm [thread:$0]  %s1188, 16, %s3, [#allocation4]
    $region21: #{forward.1} parent=1 // pred_fallthru
      _
    // Predicated region
    $region22: #{forward.1} parent=1 // pred_check
      _
    $region23: #{forward.1} parent=1 // pred_check_branch
      %1192 = sbr.rel (0) target = $region25
    $region24: #{forward.1} parent=1 // pred_region
      %1193 = dma.done [#allocation4], 16
    $region25: #{forward.1} parent=1 // pred_fallthru
      _
    %1194 = vsyncpa [#allocation3], 1
    %1195 = vsyncpa [#allocation4], 1

</llo_original>
